<compile_context>
chip_gen: v7x
topology: tpu7x:2x2x1
jax: 0.10.0
libtpu: 0.0.40
codegen_flags: <defaults>
</compile_context>

<pallas_src>
import jax
import jax.numpy as jnp
from jax.experimental import pallas as pl
from jax.experimental.pallas import tpu as pltpu

# Padded hidden widths (lane-aligned multiples of 128, >= the PyTorch 400/300).
H1 = 512
H2 = 384


def _round_up(x, m):
    return (x + m - 1) // m * m


def dqn_kernel(x_ref, w1_ref, b1_ref, w2_ref, b2_ref, w3_ref, b3_ref, o_ref):
    # Layer 1: Linear + ReLU (bf16 operands, f32 accumulation on the MXU).
    h1 = jnp.dot(x_ref[...], w1_ref[...], preferred_element_type=jnp.float32)
    h1 = jnp.maximum(h1 + b1_ref[...], 0.0).astype(jnp.bfloat16)
    # Layer 2: Linear + ReLU.
    h2 = jnp.dot(h1, w2_ref[...], preferred_element_type=jnp.float32)
    h2 = jnp.maximum(h2 + b2_ref[...], 0.0).astype(jnp.bfloat16)
    # Layer 3: Linear + Tanh (tanh runs on the EUP in f32).
    q = jnp.dot(h2, w3_ref[...], preferred_element_type=jnp.float32)
    o_ref[...] = jnp.tanh(q + b3_ref[...]).astype(o_ref.dtype)


def init_dqn_params(key, obs_size, act_size):
    """PyTorch-Linear-style init (uniform +/- 1/sqrt(fan_in)), stored (in, out)."""
    dims = [(obs_size, 400), (400, 300), (300, act_size)]
    params = {}
    for i, (fan_in, fan_out) in enumerate(dims, start=1):
        key, kw, kb = jax.random.split(key, 3)
        bound = 1.0 / jnp.sqrt(fan_in)
        params[f"w{i}"] = jax.random.uniform(
            kw, (fan_in, fan_out), jnp.float32, minval=-bound, maxval=bound)
        params[f"b{i}"] = jax.random.uniform(
            kb, (1, fan_out), jnp.float32, minval=-bound, maxval=bound)
    return params


def prepare_params(params, obs_size):
    """Pad once to MXU-friendly shapes and cast weights to bf16 (biases stay f32).

    Zero padding is exact: padded input features see zero weights, padded hidden
    units have zero weight + zero bias so ReLU(0) = 0 contributes nothing, and
    padded output lanes are tanh(0) = 0 and are sliced away by the wrapper.
    """
    obs_p = _round_up(max(obs_size, 1), 128)
    act_size = params["w3"].shape[1]
    act_p = _round_up(max(act_size, 1), 128)

    def pad2(a, rows, cols):
        return jnp.pad(a, ((0, rows - a.shape[0]), (0, cols - a.shape[1])))

    return {
        "w1": pad2(params["w1"], obs_p, H1).astype(jnp.bfloat16),
        "b1": pad2(params["b1"], 1, H1).astype(jnp.float32),
        "w2": pad2(params["w2"], H1, H2).astype(jnp.bfloat16),
        "b2": pad2(params["b2"], 1, H2).astype(jnp.float32),
        "w3": pad2(params["w3"], H2, act_p).astype(jnp.bfloat16),
        "b3": pad2(params["b3"], 1, act_p).astype(jnp.float32),
    }


def dqn_forward(x, padded_params, act_size, *, block_b=256):
    """x: (B, obs_size) f32.  padded_params: output of prepare_params.

    Returns (B, act_size) f32 Q-values.
    """
    w1, b1 = padded_params["w1"], padded_params["b1"]
    w2, b2 = padded_params["w2"], padded_params["b2"]
    w3, b3 = padded_params["w3"], padded_params["b3"]

    B, obs = x.shape
    obs_p = w1.shape[0]
    act_p = w3.shape[1]

    # Batch tile: multiple of 8 (sublane), capped at block_b; small batches
    # collapse to a single grid step so no per-step overhead is added.
    tb = min(block_b, _round_up(B, 8))
    b_pad = _round_up(B, tb)
    grid = (pl.cdiv(b_pad, tb),)

    # Zero-pad batch + features; cast activations to bf16 for the MXU.
    x_p = jnp.pad(x, ((0, b_pad - B), (0, obs_p - obs))).astype(jnp.bfloat16)

    flops = 2 * b_pad * (obs_p * H1 + H1 * H2 + H2 * act_p)
    bytes_accessed = (
        x_p.size * 2                                   # bf16 activations in
        + (w1.size + w2.size + w3.size) * 2            # bf16 weights
        + (b1.size + b2.size + b3.size) * 4            # f32 biases
        + b_pad * act_p * 4                            # f32 output
    )
    cost = pl.CostEstimate(
        flops=flops, transcendentals=b_pad * act_p, bytes_accessed=bytes_accessed)

    resident = lambda i: (0, 0)   # weights/biases stay VMEM-resident across the grid
    out = pl.pallas_call(
        dqn_kernel,
        out_shape=jax.ShapeDtypeStruct((b_pad, act_p), jnp.float32),
        grid_spec=pltpu.PrefetchScalarGridSpec(
            num_scalar_prefetch=0,
            grid=grid,
            in_specs=[
                pl.BlockSpec((tb, obs_p), lambda i: (i, 0)),   # x tile (pipelined)
                pl.BlockSpec((obs_p, H1), resident),
                pl.BlockSpec((1, H1), resident),
                pl.BlockSpec((H1, H2), resident),
                pl.BlockSpec((1, H2), resident),
                pl.BlockSpec((H2, act_p), resident),
                pl.BlockSpec((1, act_p), resident),
            ],
            out_specs=pl.BlockSpec((tb, act_p), lambda i: (i, 0)),
        ),
        compiler_params=pltpu.CompilerParams(
            dimension_semantics=("parallel",)),   # shard batch over TCs (v7x)
        cost_estimate=cost,
    )(x_p, w1, b1, w2, b2, w3, b3)

    return out[:B, :act_size]


def dqn_reference(x, params):
    h1 = jnp.maximum(x @ params["w1"] + params["b1"], 0.0)
    h2 = jnp.maximum(h1 @ params["w2"] + params["b2"], 0.0)
    return jnp.tanh(h2 @ params["w3"] + params["b3"])


if __name__ == "__main__":
    obs_size, act_size, batch = 32, 8, 8
    key = jax.random.PRNGKey(0)
    key, kx = jax.random.split(key)
    x = jax.random.normal(kx, (batch, obs_size), jnp.float32)

    params = init_dqn_params(key, obs_size, act_size)
    padded = prepare_params(params, obs_size)

    out = dqn_forward(x, padded, act_size)
    jax.block_until_ready(out)

    ref = dqn_reference(x, params)   # f32 reference on the unpadded params
    assert out.shape == (batch, act_size)
    # bf16 matmul operands -> loosened tolerance vs the f32 reference.
    assert jnp.allclose(out, ref, atol=5e-2, rtol=5e-2), "mismatch vs reference"
    print("KERNEL_OK")
</pallas_src>

<mosaic_0001>
module attributes {stable_mosaic.version = 11 : i64} {
  func.func @dqn_kernel(%arg0: i32, %arg1: memref<8x128xbf16, #tpu.memory_space<vmem>>, %arg2: memref<128x512xbf16, #tpu.memory_space<vmem>>, %arg3: memref<1x512xf32, #tpu.memory_space<vmem>>, %arg4: memref<512x384xbf16, #tpu.memory_space<vmem>>, %arg5: memref<1x384xf32, #tpu.memory_space<vmem>>, %arg6: memref<384x128xbf16, #tpu.memory_space<vmem>>, %arg7: memref<1x128xf32, #tpu.memory_space<vmem>>, %arg8: memref<8x128xf32, #tpu.memory_space<vmem>>) attributes {dimension_semantics = [#tpu.dimension_semantics<parallel>], iteration_bounds = array<i64: 1>, scalar_prefetch = 0 : i64, scratch_operands = 0 : i64, tpu.core_type = #tpu.core_type<tc>, window_params = [{transform_indices = @transform_0, window_bounds = array<i64: 8, 128>}, {pipeline_mode = #tpu.pipeline_mode<synchronous>, transform_indices = @transform_1, window_bounds = array<i64: 128, 512>}, {pipeline_mode = #tpu.pipeline_mode<synchronous>, transform_indices = @transform_2, window_bounds = array<i64: 1, 512>}, {pipeline_mode = #tpu.pipeline_mode<synchronous>, transform_indices = @transform_3, window_bounds = array<i64: 512, 384>}, {pipeline_mode = #tpu.pipeline_mode<synchronous>, transform_indices = @transform_4, window_bounds = array<i64: 1, 384>}, {pipeline_mode = #tpu.pipeline_mode<synchronous>, transform_indices = @transform_5, window_bounds = array<i64: 384, 128>}, {pipeline_mode = #tpu.pipeline_mode<synchronous>, transform_indices = @transform_6, window_bounds = array<i64: 1, 128>}, {transform_indices = @transform_7, window_bounds = array<i64: 8, 128>}]} {
    %c0 = arith.constant 0 : index
    %c0_0 = arith.constant 0 : index
    %0 = vector.load %arg1[%c0, %c0_0] : memref<8x128xbf16, #tpu.memory_space<vmem>>, vector<8x128xbf16>
    %c0_1 = arith.constant 0 : index
    %c0_2 = arith.constant 0 : index
    %1 = vector.load %arg2[%c0_1, %c0_2] : memref<128x512xbf16, #tpu.memory_space<vmem>>, vector<128x512xbf16>
    %cst = arith.constant dense<0.000000e+00> : vector<8x512xf32>
    %2 = tpu.matmul %0, %1, %cst {dimension_numbers = #tpu.dot_dimension_numbers<[1], [0], [0], [1], [0, 0, 1, 1], [], []>} : vector<8x128xbf16>, vector<128x512xbf16>, vector<8x512xf32> -> vector<8x512xf32>
    %c0_3 = arith.constant 0 : index
    %c0_4 = arith.constant 0 : index
    %3 = vector.load %arg3[%c0_3, %c0_4] : memref<1x512xf32, #tpu.memory_space<vmem>>, vector<1x512xf32>
    %4 = vector.broadcast %3 : vector<1x512xf32> to vector<8x512xf32>
    %5 = arith.addf %2, %4 : vector<8x512xf32>
    %cst_5 = arith.constant 0.000000e+00 : f32
    %6 = vector.broadcast %cst_5 : f32 to vector<8x512xf32>
    %7 = arith.maximumf %5, %6 : vector<8x512xf32>
    %8 = arith.truncf %7 : vector<8x512xf32> to vector<8x512xbf16>
    %c0_6 = arith.constant 0 : index
    %c0_7 = arith.constant 0 : index
    %9 = vector.load %arg4[%c0_6, %c0_7] : memref<512x384xbf16, #tpu.memory_space<vmem>>, vector<512x384xbf16>
    %cst_8 = arith.constant dense<0.000000e+00> : vector<8x384xf32>
    %10 = tpu.matmul %8, %9, %cst_8 {dimension_numbers = #tpu.dot_dimension_numbers<[1], [0], [0], [1], [0, 0, 1, 1], [], []>} : vector<8x512xbf16>, vector<512x384xbf16>, vector<8x384xf32> -> vector<8x384xf32>
    %c0_9 = arith.constant 0 : index
    %c0_10 = arith.constant 0 : index
    %11 = vector.load %arg5[%c0_9, %c0_10] : memref<1x384xf32, #tpu.memory_space<vmem>>, vector<1x384xf32>
    %12 = vector.broadcast %11 : vector<1x384xf32> to vector<8x384xf32>
    %13 = arith.addf %10, %12 : vector<8x384xf32>
    %cst_11 = arith.constant 0.000000e+00 : f32
    %14 = vector.broadcast %cst_11 : f32 to vector<8x384xf32>
    %15 = arith.maximumf %13, %14 : vector<8x384xf32>
    %16 = arith.truncf %15 : vector<8x384xf32> to vector<8x384xbf16>
    %c0_12 = arith.constant 0 : index
    %c0_13 = arith.constant 0 : index
    %17 = vector.load %arg6[%c0_12, %c0_13] : memref<384x128xbf16, #tpu.memory_space<vmem>>, vector<384x128xbf16>
    %cst_14 = arith.constant dense<0.000000e+00> : vector<8x128xf32>
    %18 = tpu.matmul %16, %17, %cst_14 {dimension_numbers = #tpu.dot_dimension_numbers<[1], [0], [0], [1], [0, 0, 1, 1], [], []>} : vector<8x384xbf16>, vector<384x128xbf16>, vector<8x128xf32> -> vector<8x128xf32>
    %c0_15 = arith.constant 0 : index
    %c0_16 = arith.constant 0 : index
    %19 = vector.load %arg7[%c0_15, %c0_16] : memref<1x128xf32, #tpu.memory_space<vmem>>, vector<1x128xf32>
    %20 = vector.broadcast %19 : vector<1x128xf32> to vector<8x128xf32>
    %21 = arith.addf %18, %20 : vector<8x128xf32>
    %22 = math.tanh %21 : vector<8x128xf32>
    %c0_17 = arith.constant 0 : index
    %c0_18 = arith.constant 0 : index
    %23 = vector.load %arg8[%c0_17, %c0_18] : memref<8x128xf32, #tpu.memory_space<vmem>>, vector<8x128xf32>
    tpu.vector_store %arg8[%c0_17, %c0_18], %22 {strides = array<i32>} : memref<8x128xf32, #tpu.memory_space<vmem>>, vector<8x128xf32>,
    return
  }
  func.func @transform_0(%arg0: i32) -> (i32, i32) {
    %c0_i32 = arith.constant 0 : i32
    %c0_i32_0 = arith.constant 0 : i32
    return %arg0, %c0_i32 : i32, i32
  }
  func.func @transform_1(%arg0: i32) -> (i32, i32) {
    %c0_i32 = arith.constant 0 : i32
    %c0_i32_0 = arith.constant 0 : i32
    %c0_i32_1 = arith.constant 0 : i32
    return %c0_i32, %c0_i32_0 : i32, i32
  }
  func.func @transform_2(%arg0: i32) -> (i32, i32) {
    %c0_i32 = arith.constant 0 : i32
    %c0_i32_0 = arith.constant 0 : i32
    %c0_i32_1 = arith.constant 0 : i32
    return %c0_i32, %c0_i32_0 : i32, i32
  }
  func.func @transform_3(%arg0: i32) -> (i32, i32) {
    %c0_i32 = arith.constant 0 : i32
    %c0_i32_0 = arith.constant 0 : i32
    %c0_i32_1 = arith.constant 0 : i32
    return %c0_i32, %c0_i32_0 : i32, i32
  }
  func.func @transform_4(%arg0: i32) -> (i32, i32) {
    %c0_i32 = arith.constant 0 : i32
    %c0_i32_0 = arith.constant 0 : i32
    %c0_i32_1 = arith.constant 0 : i32
    return %c0_i32, %c0_i32_0 : i32, i32
  }
  func.func @transform_5(%arg0: i32) -> (i32, i32) {
    %c0_i32 = arith.constant 0 : i32
    %c0_i32_0 = arith.constant 0 : i32
    %c0_i32_1 = arith.constant 0 : i32
    return %c0_i32, %c0_i32_0 : i32, i32
  }
  func.func @transform_6(%arg0: i32) -> (i32, i32) {
    %c0_i32 = arith.constant 0 : i32
    %c0_i32_0 = arith.constant 0 : i32
    %c0_i32_1 = arith.constant 0 : i32
    return %c0_i32, %c0_i32_0 : i32, i32
  }
  func.func @transform_7(%arg0: i32) -> (i32, i32) {
    %c0_i32 = arith.constant 0 : i32
    %c0_i32_0 = arith.constant 0 : i32
    return %arg0, %c0_i32 : i32, i32
  }
}

</mosaic_0001>

<llo_original>
// kernel: tpu_custom_call.1
$region0: #{tpu_custom_call.1}
  #allocation0 [shape = 'u32[]', space=smem, size = 0x4, offset = 0x4, fixed_abs, tag = 'smem constant byte address 0x4 - core index']
  #allocation1 [shape = 'u32[144,128]{1,0:T(1,128)}', space=vmem, size = 0x12000, scoped, tag = 'internal scratch']
  %s0 = inlined_call_operand.hbm [shape: bf16[8,128], index: 0, kind: input, shape index: {}]
  %s1 = inlined_call_operand.hbm [shape: bf16[128,512], index: 1, kind: input, shape index: {}]
  %s2 = inlined_call_operand.vmem [shape: f32[1,512], index: 2, kind: input, shape index: {}]
  %s3 = inlined_call_operand.hbm [shape: bf16[512,384], index: 3, kind: input, shape index: {}]
  %s4 = inlined_call_operand.vmem [shape: f32[1,384], index: 4, kind: input, shape index: {}]
  %s5 = inlined_call_operand.hbm [shape: bf16[384,128], index: 5, kind: input, shape index: {}]
  %s6 = inlined_call_operand.vmem [shape: f32[1,128], index: 6, kind: input, shape index: {}]
  %s7 = inlined_call_operand.hbm [shape: f32[8,128], index: 7, kind: output, shape index: {}]
  %s8 = sld [smem:[#allocation0]]
  $region54: #{tpu_custom_call.1} parent=0
    _
  %s10 = ssub.s32 1, %s8
  %s11 = scalar_select 0, %s10, %s8
  $region1: #{tpu_custom_call.1} parent=0
    #allocation2 [shape = 'u8[2048]{0}', space=vmem, size = 0x800, scoped, tag = 'input window, operand 0, single buffered']
    #allocation3 [shape = 's32[1]{0}', space=sflag, size = 0x4, scoped, tag = 'scoped memory for tpu_custom_call.1']
    #allocation4 [shape = 's32[1]{0}', space=sflag, size = 0x4, scoped, tag = 'scoped memory for tpu_custom_call.1']
    #allocation5 [shape = 'u8[131072]{0}', space=vmem, size = 0x20000, scoped, tag = 'input window, operand 1, single buffered']
    #allocation6 [shape = 's32[1]{0}', space=sflag, size = 0x4, scoped, tag = 'scoped memory for tpu_custom_call.1']
    #allocation7 [shape = 'u8[393216]{0}', space=vmem, size = 0x60000, scoped, tag = 'input window, operand 3, single buffered']
    #allocation8 [shape = 'u8[98304]{0}', space=vmem, size = 0x18000, scoped, tag = 'input window, operand 5, single buffered']
    #allocation9 [shape = 's32[1]{0}', space=sflag, size = 0x4, scoped, tag = 'scoped memory for tpu_custom_call.1']
    #allocation10 [shape = 'u8[4096]{0}', space=vmem, size = 0x1000, scoped, tag = 'output window, operand 0, single buffered']
    %12 = vsyncpa [#allocation3], 0
    %13 = vsyncpa [#allocation6], 0
    %14 = vsyncpa [#allocation9], 0
    %15 = vsyncpa [#allocation4], 0
    // Predicated region
    $region2: #{tpu_custom_call.1} parent=1 // pred_check
      _
    $region3: #{tpu_custom_call.1} parent=1 // pred_check_branch
      %17 = sbr.rel (0) target = $region5
    $region4: #{tpu_custom_call.1} parent=1 // pred_region
      %s19 = ssub.s32 64, 64
      %20 = vsyncadd [#allocation3], %s19
      %s22 = sshll.u32 [#allocation2], 4
      %s23 = int_to_ptr.vmem [resolvable:$true] %s22
      %25 = dma.hbm_to_vmem [thread:$0]  %s0, 64, %s23, [#allocation3]
    $region5: #{tpu_custom_call.1} parent=1 // pred_fallthru
      _
    // Predicated region
    $region6: #{tpu_custom_call.1} parent=1 // pred_check
      _
    $region7: #{tpu_custom_call.1} parent=1 // pred_check_branch
      %27 = sbr.rel (0) target = $region9
    $region8: #{tpu_custom_call.1} parent=1 // pred_region
      %s29 = ssub.s32 4096, 4096
      %30 = vsyncadd [#allocation6], %s29
      %s31 = sshll.u32 [#allocation5], 4
      %s32 = int_to_ptr.vmem [resolvable:$true] %s31
      %37 = dma.hbm_to_vmem [thread:$0]  %s1, 4096, %s32, [#allocation6], 256, 256, 16
    $region9: #{tpu_custom_call.1} parent=1 // pred_fallthru
      _
    // Predicated region
    $region10: #{tpu_custom_call.1} parent=1 // pred_check
      _
    $region11: #{tpu_custom_call.1} parent=1 // pred_check_branch
      %39 = sbr.rel (0) target = $region13
    $region12: #{tpu_custom_call.1} parent=1 // pred_region
      _
    $region13: #{tpu_custom_call.1} parent=1 // pred_fallthru
      _
    // Predicated region
    $region14: #{tpu_custom_call.1} parent=1 // pred_check
      _
    $region15: #{tpu_custom_call.1} parent=1 // pred_check_branch
      %41 = sbr.rel (0) target = $region17
    $region16: #{tpu_custom_call.1} parent=1 // pred_region
      %s43 = ssub.s32 12288, 12288
      %44 = vsyncadd [#allocation6], %s43
      %s45 = sshll.u32 [#allocation7], 4
      %s46 = int_to_ptr.vmem [resolvable:$true] %s45
      %51 = dma.hbm_to_vmem [thread:$0]  %s3, 12288, %s46, [#allocation6], 192, 192, 12
    $region17: #{tpu_custom_call.1} parent=1 // pred_fallthru
      _
    // Predicated region
    $region18: #{tpu_custom_call.1} parent=1 // pred_check
      _
    $region19: #{tpu_custom_call.1} parent=1 // pred_check_branch
      %53 = sbr.rel (0) target = $region21
    $region20: #{tpu_custom_call.1} parent=1 // pred_region
      _
    $region21: #{tpu_custom_call.1} parent=1 // pred_fallthru
      _
    // Predicated region
    $region22: #{tpu_custom_call.1} parent=1 // pred_check
      _
    $region23: #{tpu_custom_call.1} parent=1 // pred_check_branch
      %55 = sbr.rel (0) target = $region25
    $region24: #{tpu_custom_call.1} parent=1 // pred_region
      %s57 = ssub.s32 3072, 3072
      %58 = vsyncadd [#allocation9], %s57
      %s59 = sshll.u32 [#allocation8], 4
      %s60 = int_to_ptr.vmem [resolvable:$true] %s59
      %65 = dma.hbm_to_vmem [thread:$0]  %s5, 3072, %s60, [#allocation9], 64, 64, 4
    $region25: #{tpu_custom_call.1} parent=1 // pred_fallthru
      _
    // Predicated region
    $region26: #{tpu_custom_call.1} parent=1 // pred_check
      _
    $region27: #{tpu_custom_call.1} parent=1 // pred_check_branch
      %67 = sbr.rel (0) target = $region29
    $region28: #{tpu_custom_call.1} parent=1 // pred_region
      _
    $region29: #{tpu_custom_call.1} parent=1 // pred_fallthru
      _
    // Predicated region
    $region30: #{tpu_custom_call.1} parent=1 // pred_check
      _
    $region31: #{tpu_custom_call.1} parent=1 // pred_check_branch
      %69 = sbr.rel (0) target = $region33
    $region32: #{tpu_custom_call.1} parent=1 // pred_region
      %70 = dma.done [#allocation3], 64
    $region33: #{tpu_custom_call.1} parent=1 // pred_fallthru
      _
    // Predicated region
    $region34: #{tpu_custom_call.1} parent=1 // pred_check
      _
    $region35: #{tpu_custom_call.1} parent=1 // pred_check_branch
      %72 = sbr.rel (0) target = $region37
    $region36: #{tpu_custom_call.1} parent=1 // pred_region
      %73 = dma.done [#allocation6], 4096
    $region37: #{tpu_custom_call.1} parent=1 // pred_fallthru
      _
    // Predicated region
    $region38: #{tpu_custom_call.1} parent=1 // pred_check
      _
    $region39: #{tpu_custom_call.1} parent=1 // pred_check_branch
      %75 = sbr.rel (0) target = $region41
    $region40: #{tpu_custom_call.1} parent=1 // pred_region
      %76 = dma.done [#allocation6], 12288
    $region41: #{tpu_custom_call.1} parent=1 // pred_fallthru
      _
    // Predicated region
    $region42: #{tpu_custom_call.1} parent=1 // pred_check
      _
    $region43: #{tpu_custom_call.1} parent=1 // pred_check_branch
      %78 = sbr.rel (0) target = $region45
    $region44: #{tpu_custom_call.1} parent=1 // pred_region
      %79 = dma.done [#allocation9], 3072
    $region45: #{tpu_custom_call.1} parent=1 // pred_fallthru
      _
    %v81 = vld [vmem:[#allocation2] sm:$0xf]
    %v82 = vld [vmem:[#allocation5] sm:$0xff]
    %v83 = vld [vmem:[#allocation5 + $0x8] sm:$0xff]
    %v84 = vld [vmem:[#allocation5 + $0x10] sm:$0xff]
    %v85 = vld [vmem:[#allocation5 + $0x18] sm:$0xff]
    %v86 = vld [vmem:[#allocation5 + $0x20] sm:$0xff]
    %v87 = vld [vmem:[#allocation5 + $0x28] sm:$0xff]
    %v88 = vld [vmem:[#allocation5 + $0x30] sm:$0xff]
    %v89 = vld [vmem:[#allocation5 + $0x38] sm:$0xff]
    %v90 = vld [vmem:[#allocation5 + $0x40] sm:$0xff]
    %v91 = vld [vmem:[#allocation5 + $0x48] sm:$0xff]
    %v92 = vld [vmem:[#allocation5 + $0x50] sm:$0xff]
    %v93 = vld [vmem:[#allocation5 + $0x58] sm:$0xff]
    %v94 = vld [vmem:[#allocation5 + $0x60] sm:$0xff]
    %v95 = vld [vmem:[#allocation5 + $0x68] sm:$0xff]
    %v96 = vld [vmem:[#allocation5 + $0x70] sm:$0xff]
    %v97 = vld [vmem:[#allocation5 + $0x78] sm:$0xff]
    %v98 = vld [vmem:[#allocation5 + $0x80] sm:$0xff]
    %v99 = vld [vmem:[#allocation5 + $0x88] sm:$0xff]
    %v100 = vld [vmem:[#allocation5 + $0x90] sm:$0xff]
    %v101 = vld [vmem:[#allocation5 + $0x98] sm:$0xff]
    %v102 = vld [vmem:[#allocation5 + $0xa0] sm:$0xff]
    %v103 = vld [vmem:[#allocation5 + $0xa8] sm:$0xff]
    %v104 = vld [vmem:[#allocation5 + $0xb0] sm:$0xff]
    %v105 = vld [vmem:[#allocation5 + $0xb8] sm:$0xff]
    %v106 = vld [vmem:[#allocation5 + $0xc0] sm:$0xff]
    %v107 = vld [vmem:[#allocation5 + $0xc8] sm:$0xff]
    %v108 = vld [vmem:[#allocation5 + $0xd0] sm:$0xff]
    %v109 = vld [vmem:[#allocation5 + $0xd8] sm:$0xff]
    %v110 = vld [vmem:[#allocation5 + $0xe0] sm:$0xff]
    %v111 = vld [vmem:[#allocation5 + $0xe8] sm:$0xff]
    %v112 = vld [vmem:[#allocation5 + $0xf0] sm:$0xff]
    %v113 = vld [vmem:[#allocation5 + $0xf8] sm:$0xff]
    %v114 = vld [vmem:[%s2] sm:$0xf]
    %v116 = vlaneseq
    %v117 = vshrl.u32 %v116, 7
    %v118 = vsub.s32 0, %v117
    %v119 = vrot.slane %v114, %v118
    %v120 = vlaneseq
    %v121 = vshrl.u32 %v120, 7
    %v122 = vsub.s32 1, %v121
    %v123 = vrot.slane %v114, %v122
    %v124 = vlaneseq
    %v125 = vshrl.u32 %v124, 7
    %v126 = vsub.s32 2, %v125
    %v127 = vrot.slane %v114, %v126
    %v128 = vlaneseq
    %v129 = vshrl.u32 %v128, 7
    %v130 = vsub.s32 3, %v129
    %v131 = vrot.slane %v114, %v130
    %v168 = vunpack.c.l.b16 %v82
    %v169 = vunpack.c.h.b16 %v82
    %v170 = vunpack.c.l.b16 %v83
    %v171 = vunpack.c.h.b16 %v83
    %v172 = vunpack.c.l.b16 %v84
    %v173 = vunpack.c.h.b16 %v84
    %v174 = vunpack.c.l.b16 %v85
    %v175 = vunpack.c.h.b16 %v85
    %v176 = vunpack.c.l.b16 %v86
    %v177 = vunpack.c.h.b16 %v86
    %v178 = vunpack.c.l.b16 %v87
    %v179 = vunpack.c.h.b16 %v87
    %v180 = vunpack.c.l.b16 %v88
    %v181 = vunpack.c.h.b16 %v88
    %v182 = vunpack.c.l.b16 %v89
    %v183 = vunpack.c.h.b16 %v89
    %v184 = vunpack.c.l.b16 %v90
    %v185 = vunpack.c.h.b16 %v90
    %v186 = vunpack.c.l.b16 %v91
    %v187 = vunpack.c.h.b16 %v91
    %v188 = vunpack.c.l.b16 %v92
    %v189 = vunpack.c.h.b16 %v92
    %v190 = vunpack.c.l.b16 %v93
    %v191 = vunpack.c.h.b16 %v93
    %v192 = vunpack.c.l.b16 %v94
    %v193 = vunpack.c.h.b16 %v94
    %v194 = vunpack.c.l.b16 %v95
    %v195 = vunpack.c.h.b16 %v95
    %v196 = vunpack.c.l.b16 %v96
    %v197 = vunpack.c.h.b16 %v96
    %v198 = vunpack.c.l.b16 %v97
    %v199 = vunpack.c.h.b16 %v97
    %v200 = vunpack.c.l.b16 %v98
    %v201 = vunpack.c.h.b16 %v98
    %v202 = vunpack.c.l.b16 %v99
    %v203 = vunpack.c.h.b16 %v99
    %v204 = vunpack.c.l.b16 %v100
    %v205 = vunpack.c.h.b16 %v100
    %v206 = vunpack.c.l.b16 %v101
    %v207 = vunpack.c.h.b16 %v101
    %v208 = vunpack.c.l.b16 %v102
    %v209 = vunpack.c.h.b16 %v102
    %v210 = vunpack.c.l.b16 %v103
    %v211 = vunpack.c.h.b16 %v103
    %v212 = vunpack.c.l.b16 %v104
    %v213 = vunpack.c.h.b16 %v104
    %v214 = vunpack.c.l.b16 %v105
    %v215 = vunpack.c.h.b16 %v105
    %v216 = vunpack.c.l.b16 %v106
    %v217 = vunpack.c.h.b16 %v106
    %v218 = vunpack.c.l.b16 %v107
    %v219 = vunpack.c.h.b16 %v107
    %v220 = vunpack.c.l.b16 %v108
    %v221 = vunpack.c.h.b16 %v108
    %v222 = vunpack.c.l.b16 %v109
    %v223 = vunpack.c.h.b16 %v109
    %v224 = vunpack.c.l.b16 %v110
    %v225 = vunpack.c.h.b16 %v110
    %v226 = vunpack.c.l.b16 %v111
    %v227 = vunpack.c.h.b16 %v111
    %v228 = vunpack.c.l.b16 %v112
    %v229 = vunpack.c.h.b16 %v112
    %v230 = vunpack.c.l.b16 %v113
    %v231 = vunpack.c.h.b16 %v113
    %v232 = vpack.c.b16 %v172, %v168
    %v233 = vpack.c.b16 %v173, %v169
    %v234 = vpack.c.b16 %v174, %v170
    %v235 = vpack.c.b16 %v175, %v171
    %v236 = vpack.c.b16 %v180, %v176
    %v237 = vpack.c.b16 %v181, %v177
    %v238 = vpack.c.b16 %v182, %v178
    %v239 = vpack.c.b16 %v183, %v179
    %v240 = vpack.c.b16 %v188, %v184
    %v241 = vpack.c.b16 %v189, %v185
    %v242 = vpack.c.b16 %v190, %v186
    %v243 = vpack.c.b16 %v191, %v187
    %v244 = vpack.c.b16 %v196, %v192
    %v245 = vpack.c.b16 %v197, %v193
    %v246 = vpack.c.b16 %v198, %v194
    %v247 = vpack.c.b16 %v199, %v195
    %v248 = vpack.c.b16 %v204, %v200
    %v249 = vpack.c.b16 %v205, %v201
    %v250 = vpack.c.b16 %v206, %v202
    %v251 = vpack.c.b16 %v207, %v203
    %v252 = vpack.c.b16 %v212, %v208
    %v253 = vpack.c.b16 %v213, %v209
    %v254 = vpack.c.b16 %v214, %v210
    %v255 = vpack.c.b16 %v215, %v211
    %v256 = vpack.c.b16 %v220, %v216
    %v257 = vpack.c.b16 %v221, %v217
    %v258 = vpack.c.b16 %v222, %v218
    %v259 = vpack.c.b16 %v223, %v219
    %v260 = vpack.c.b16 %v228, %v224
    %v261 = vpack.c.b16 %v229, %v225
    %v262 = vpack.c.b16 %v230, %v226
    %v263 = vpack.c.b16 %v231, %v227
    %296 = vmatprep.subr.bf16.mxu0 %v233
    %297 = vmatpush1.bf16.msra.mxu0 %v232
    %298 = vmatprep.subr.bf16.mxu0 %v237
    %299 = vmatpush1.bf16.msra.mxu0 %v236
    %300 = vmatprep.subr.bf16.mxu0 %v241
    %301 = vmatpush1.bf16.msra.mxu0 %v240
    %302 = vmatprep.subr.bf16.mxu0 %v245
    %303 = vmatpush1.bf16.msra.mxu0 %v244
    %304 = vmatprep.subr.bf16.mxu0 %v249
    %305 = vmatpush1.bf16.msra.mxu0 %v248
    %306 = vmatprep.subr.bf16.mxu0 %v253
    %307 = vmatpush1.bf16.msra.mxu0 %v252
    %308 = vmatprep.subr.bf16.mxu0 %v257
    %309 = vmatpush1.bf16.msra.mxu0 %v256
    %310 = vmatprep.subr.bf16.mxu0 %v261
    %311 = vmatpush1.bf16.msra.mxu0 %v260
    %312 = vmatprep.subr.bf16.mxu0 0
    %313 = vmatpush1.bf16.msra.mxu0 0
    %314 = vmatprep.subr.bf16.mxu0 0
    %315 = vmatpush1.bf16.msra.mxu0 0
    %316 = vmatprep.subr.bf16.mxu0 0
    %317 = vmatpush1.bf16.msra.mxu0 0
    %318 = vmatprep.subr.bf16.mxu0 0
    %319 = vmatpush1.bf16.msra.mxu0 0
    %320 = vmatprep.subr.bf16.mxu0 0
    %321 = vmatpush1.bf16.msra.mxu0 0
    %322 = vmatprep.subr.bf16.mxu0 0
    %323 = vmatpush1.bf16.msra.mxu0 0
    %324 = vmatprep.subr.bf16.mxu0 0
    %325 = vmatpush1.bf16.msra.mxu0 0
    %326 = vmatprep.subr.bf16.mxu0 0
    %327 = vmatpush1.bf16.msra.mxu0 0
    %328 = vmatprep.mubr.bf16.mxu0 0
    %329 = vmatmul.mubr.bf16.gmra.mrb[0].mxu0 %v81
    %v330 = vpop.f32.mrb[0].mxu0
    %v331 = vadd.f32 %v119, %v330
    %v332 = vpop.f32.mrb[0].mxu0
    %v333 = vadd.f32 %v123, %v332
    %v334 = vpop.f32.mrb[0].mxu0
    %v335 = vpop.f32.mrb[0].mxu0
    %336 = vdwg.mxu0
    %337 = vmatprep.subr.bf16.mxu0 %v235
    %338 = vmatpush1.bf16.msra.mxu0 %v234
    %339 = vmatprep.subr.bf16.mxu0 %v239
    %340 = vmatpush1.bf16.msra.mxu0 %v238
    %341 = vmatprep.subr.bf16.mxu0 %v243
    %342 = vmatpush1.bf16.msra.mxu0 %v242
    %343 = vmatprep.subr.bf16.mxu0 %v247
    %344 = vmatpush1.bf16.msra.mxu0 %v246
    %345 = vmatprep.subr.bf16.mxu0 %v251
    %346 = vmatpush1.bf16.msra.mxu0 %v250
    %347 = vmatprep.subr.bf16.mxu0 %v255
    %348 = vmatpush1.bf16.msra.mxu0 %v254
    %349 = vmatprep.subr.bf16.mxu0 %v259
    %350 = vmatpush1.bf16.msra.mxu0 %v258
    %351 = vmatprep.subr.bf16.mxu0 %v263
    %352 = vmatpush1.bf16.msra.mxu0 %v262
    %353 = vmatprep.subr.bf16.mxu0 0
    %354 = vmatpush1.bf16.msra.mxu0 0
    %355 = vmatprep.subr.bf16.mxu0 0
    %356 = vmatpush1.bf16.msra.mxu0 0
    %357 = vmatprep.subr.bf16.mxu0 0
    %358 = vmatpush1.bf16.msra.mxu0 0
    %359 = vmatprep.subr.bf16.mxu0 0
    %360 = vmatpush1.bf16.msra.mxu0 0
    %361 = vmatprep.subr.bf16.mxu0 0
    %362 = vmatpush1.bf16.msra.mxu0 0
    %363 = vmatprep.subr.bf16.mxu0 0
    %364 = vmatpush1.bf16.msra.mxu0 0
    %365 = vmatprep.subr.bf16.mxu0 0
    %366 = vmatpush1.bf16.msra.mxu0 0
    %367 = vmatprep.subr.bf16.mxu0 0
    %368 = vmatpush1.bf16.msra.mxu0 0
    %369 = vmatprep.mubr.bf16.mxu0 0
    %370 = vmatmul.mubr.bf16.gmra.mrb[0].mxu0 %v81
    %v371 = vpop.f32.mrb[0].mxu0
    %v372 = vadd.f32 %v127, %v371
    %v373 = vpop.f32.mrb[0].mxu0
    %v374 = vadd.f32 %v131, %v373
    %v375 = vpop.f32.mrb[0].mxu0
    %v376 = vpop.f32.mrb[0].mxu0
    %377 = vdwg.mxu0
    %v378 = vmax.f32 %v331, 0.0
    %v379 = vmax.f32 %v333, 0.0
    %v380 = vmax.f32 %v372, 0.0
    %v381 = vmax.f32 %v374, 0.0
    %v382 = vpack.c.bf16 %v378, %v378
    %v383 = vpack.c.bf16 %v379, %v379
    %v384 = vpack.c.bf16 %v380, %v380
    %v385 = vpack.c.bf16 %v381, %v381
    %v386 = vld [vmem:[#allocation7] sm:$0xff]
    %v387 = vld [vmem:[#allocation7 + $0x8] sm:$0xf]
    %v388 = vld [vmem:[#allocation7 + $0xc] sm:$0xff]
    %v389 = vld [vmem:[#allocation7 + $0x14] sm:$0xf]
    %v390 = vld [vmem:[#allocation7 + $0x18] sm:$0xff]
    %v391 = vld [vmem:[#allocation7 + $0x20] sm:$0xf]
    %v392 = vld [vmem:[#allocation7 + $0x24] sm:$0xff]
    %v393 = vld [vmem:[#allocation7 + $0x2c] sm:$0xf]
    %v394 = vld [vmem:[#allocation7 + $0x30] sm:$0xff]
    %v395 = vld [vmem:[#allocation7 + $0x38] sm:$0xf]
    %v396 = vld [vmem:[#allocation7 + $0x3c] sm:$0xff]
    %v397 = vld [vmem:[#allocation7 + $0x44] sm:$0xf]
    %v398 = vld [vmem:[#allocation7 + $0x48] sm:$0xff]
    %v399 = vld [vmem:[#allocation7 + $0x50] sm:$0xf]
    %v400 = vld [vmem:[#allocation7 + $0x54] sm:$0xff]
    %v401 = vld [vmem:[#allocation7 + $0x5c] sm:$0xf]
    %v402 = vld [vmem:[#allocation7 + $0x60] sm:$0xff]
    %v403 = vld [vmem:[#allocation7 + $0x68] sm:$0xf]
    %v404 = vld [vmem:[#allocation7 + $0x6c] sm:$0xff]
    %v405 = vld [vmem:[#allocation7 + $0x74] sm:$0xf]
    %v406 = vld [vmem:[#allocation7 + $0x78] sm:$0xff]
    %v407 = vld [vmem:[#allocation7 + $0x80] sm:$0xf]
    %v408 = vld [vmem:[#allocation7 + $0x84] sm:$0xff]
    %v409 = vld [vmem:[#allocation7 + $0x8c] sm:$0xf]
    %v410 = vld [vmem:[#allocation7 + $0x90] sm:$0xff]
    %v411 = vld [vmem:[#allocation7 + $0x98] sm:$0xf]
    %v412 = vld [vmem:[#allocation7 + $0x9c] sm:$0xff]
    %v413 = vld [vmem:[#allocation7 + $0xa4] sm:$0xf]
    %v414 = vld [vmem:[#allocation7 + $0xa8] sm:$0xff]
    %v415 = vld [vmem:[#allocation7 + $0xb0] sm:$0xf]
    %v416 = vld [vmem:[#allocation7 + $0xb4] sm:$0xff]
    %v417 = vld [vmem:[#allocation7 + $0xbc] sm:$0xf]
    %v418 = vld [vmem:[#allocation7 + $0xc0] sm:$0xff]
    %v419 = vld [vmem:[#allocation7 + $0xc8] sm:$0xf]
    %v420 = vld [vmem:[#allocation7 + $0xcc] sm:$0xff]
    %v421 = vld [vmem:[#allocation7 + $0xd4] sm:$0xf]
    %v422 = vld [vmem:[#allocation7 + $0xd8] sm:$0xff]
    %v423 = vld [vmem:[#allocation7 + $0xe0] sm:$0xf]
    %v424 = vld [vmem:[#allocation7 + $0xe4] sm:$0xff]
    %v425 = vld [vmem:[#allocation7 + $0xec] sm:$0xf]
    %v426 = vld [vmem:[#allocation7 + $0xf0] sm:$0xff]
    %v427 = vld [vmem:[#allocation7 + $0xf8] sm:$0xf]
    %v428 = vld [vmem:[#allocation7 + $0xfc] sm:$0xff]
    %v429 = vld [vmem:[#allocation7 + $0x104] sm:$0xf]
    %v430 = vld [vmem:[#allocation7 + $0x108] sm:$0xff]
    %v431 = vld [vmem:[#allocation7 + $0x110] sm:$0xf]
    %v432 = vld [vmem:[#allocation7 + $0x114] sm:$0xff]
    %v433 = vld [vmem:[#allocation7 + $0x11c] sm:$0xf]
    %v434 = vld [vmem:[#allocation7 + $0x120] sm:$0xff]
    %v435 = vld [vmem:[#allocation7 + $0x128] sm:$0xf]
    %v436 = vld [vmem:[#allocation7 + $0x12c] sm:$0xff]
    %v437 = vld [vmem:[#allocation7 + $0x134] sm:$0xf]
    %v438 = vld [vmem:[#allocation7 + $0x138] sm:$0xff]
    %v439 = vld [vmem:[#allocation7 + $0x140] sm:$0xf]
    %v440 = vld [vmem:[#allocation7 + $0x144] sm:$0xff]
    %v441 = vld [vmem:[#allocation7 + $0x14c] sm:$0xf]
    %v442 = vld [vmem:[#allocation7 + $0x150] sm:$0xff]
    %v443 = vld [vmem:[#allocation7 + $0x158] sm:$0xf]
    %v444 = vld [vmem:[#allocation7 + $0x15c] sm:$0xff]
    %v445 = vld [vmem:[#allocation7 + $0x164] sm:$0xf]
    %v446 = vld [vmem:[#allocation7 + $0x168] sm:$0xff]
    %v447 = vld [vmem:[#allocation7 + $0x170] sm:$0xf]
    %v448 = vld [vmem:[#allocation7 + $0x174] sm:$0xff]
    %v449 = vld [vmem:[#allocation7 + $0x17c] sm:$0xf]
    %v450 = vld [vmem:[#allocation7 + $0x180] sm:$0xff]
    %v451 = vld [vmem:[#allocation7 + $0x188] sm:$0xf]
    %v452 = vld [vmem:[#allocation7 + $0x18c] sm:$0xff]
    %v453 = vld [vmem:[#allocation7 + $0x194] sm:$0xf]
    %v454 = vld [vmem:[#allocation7 + $0x198] sm:$0xff]
    %v455 = vld [vmem:[#allocation7 + $0x1a0] sm:$0xf]
    %v456 = vld [vmem:[#allocation7 + $0x1a4] sm:$0xff]
    %v457 = vld [vmem:[#allocation7 + $0x1ac] sm:$0xf]
    %v458 = vld [vmem:[#allocation7 + $0x1b0] sm:$0xff]
    %v459 = vld [vmem:[#allocation7 + $0x1b8] sm:$0xf]
    %v460 = vld [vmem:[#allocation7 + $0x1bc] sm:$0xff]
    %v461 = vld [vmem:[#allocation7 + $0x1c4] sm:$0xf]
    %v462 = vld [vmem:[#allocation7 + $0x1c8] sm:$0xff]
    %v463 = vld [vmem:[#allocation7 + $0x1d0] sm:$0xf]
    %v464 = vld [vmem:[#allocation7 + $0x1d4] sm:$0xff]
    %v465 = vld [vmem:[#allocation7 + $0x1dc] sm:$0xf]
    %v466 = vld [vmem:[#allocation7 + $0x1e0] sm:$0xff]
    %v467 = vld [vmem:[#allocation7 + $0x1e8] sm:$0xf]
    %v468 = vld [vmem:[#allocation7 + $0x1ec] sm:$0xff]
    %v469 = vld [vmem:[#allocation7 + $0x1f4] sm:$0xf]
    %v470 = vld [vmem:[#allocation7 + $0x1f8] sm:$0xff]
    %v471 = vld [vmem:[#allocation7 + $0x200] sm:$0xf]
    %v472 = vld [vmem:[#allocation7 + $0x204] sm:$0xff]
    %v473 = vld [vmem:[#allocation7 + $0x20c] sm:$0xf]
    %v474 = vld [vmem:[#allocation7 + $0x210] sm:$0xff]
    %v475 = vld [vmem:[#allocation7 + $0x218] sm:$0xf]
    %v476 = vld [vmem:[#allocation7 + $0x21c] sm:$0xff]
    %v477 = vld [vmem:[#allocation7 + $0x224] sm:$0xf]
    %v478 = vld [vmem:[#allocation7 + $0x228] sm:$0xff]
    %v479 = vld [vmem:[#allocation7 + $0x230] sm:$0xf]
    %v480 = vld [vmem:[#allocation7 + $0x234] sm:$0xff]
    %v481 = vld [vmem:[#allocation7 + $0x23c] sm:$0xf]
    %v482 = vld [vmem:[#allocation7 + $0x240] sm:$0xff]
    %v483 = vld [vmem:[#allocation7 + $0x248] sm:$0xf]
    %v484 = vld [vmem:[#allocation7 + $0x24c] sm:$0xff]
    %v485 = vld [vmem:[#allocation7 + $0x254] sm:$0xf]
    %v486 = vld [vmem:[#allocation7 + $0x258] sm:$0xff]
    %v487 = vld [vmem:[#allocation7 + $0x260] sm:$0xf]
    %v488 = vld [vmem:[#allocation7 + $0x264] sm:$0xff]
    %v489 = vld [vmem:[#allocation7 + $0x26c] sm:$0xf]
    %v490 = vld [vmem:[#allocation7 + $0x270] sm:$0xff]
    %v491 = vld [vmem:[#allocation7 + $0x278] sm:$0xf]
    %v492 = vld [vmem:[#allocation7 + $0x27c] sm:$0xff]
    %v493 = vld [vmem:[#allocation7 + $0x284] sm:$0xf]
    %v494 = vld [vmem:[#allocation7 + $0x288] sm:$0xff]
    %v495 = vld [vmem:[#allocation7 + $0x290] sm:$0xf]
    %v496 = vld [vmem:[#allocation7 + $0x294] sm:$0xff]
    %v497 = vld [vmem:[#allocation7 + $0x29c] sm:$0xf]
    %v498 = vld [vmem:[#allocation7 + $0x2a0] sm:$0xff]
    %v499 = vld [vmem:[#allocation7 + $0x2a8] sm:$0xf]
    %v500 = vld [vmem:[#allocation7 + $0x2ac] sm:$0xff]
    %v501 = vld [vmem:[#allocation7 + $0x2b4] sm:$0xf]
    %v502 = vld [vmem:[#allocation7 + $0x2b8] sm:$0xff]
    %v503 = vld [vmem:[#allocation7 + $0x2c0] sm:$0xf]
    %v504 = vld [vmem:[#allocation7 + $0x2c4] sm:$0xff]
    %v505 = vld [vmem:[#allocation7 + $0x2cc] sm:$0xf]
    %v506 = vld [vmem:[#allocation7 + $0x2d0] sm:$0xff]
    %v507 = vld [vmem:[#allocation7 + $0x2d8] sm:$0xf]
    %v508 = vld [vmem:[#allocation7 + $0x2dc] sm:$0xff]
    %v509 = vld [vmem:[#allocation7 + $0x2e4] sm:$0xf]
    %v510 = vld [vmem:[#allocation7 + $0x2e8] sm:$0xff]
    %v511 = vld [vmem:[#allocation7 + $0x2f0] sm:$0xf]
    %v512 = vld [vmem:[#allocation7 + $0x2f4] sm:$0xff]
    %v513 = vld [vmem:[#allocation7 + $0x2fc] sm:$0xf]
    %v514 = vld [vmem:[%s4] sm:$0x7]
    %v516 = vlaneseq
    %v517 = vshrl.u32 %v516, 7
    %v518 = vsub.s32 0, %v517
    %v519 = vrot.slane %v514, %v518
    %v520 = vlaneseq
    %v521 = vshrl.u32 %v520, 7
    %v522 = vsub.s32 1, %v521
    %v523 = vrot.slane %v514, %v522
    %v524 = vlaneseq
    %v525 = vshrl.u32 %v524, 7
    %v526 = vsub.s32 2, %v525
    %v527 = vrot.slane %v514, %v526
    %v659 = vunpack.c.l.b16 %v386
    %v660 = vunpack.c.h.b16 %v386
    %v661 = vunpack.c.l.b16 %v387
    %v662 = vunpack.c.l.b16 %v388
    %v663 = vunpack.c.h.b16 %v388
    %v664 = vunpack.c.l.b16 %v389
    %v665 = vunpack.c.l.b16 %v390
    %v666 = vunpack.c.h.b16 %v390
    %v667 = vunpack.c.l.b16 %v391
    %v668 = vunpack.c.l.b16 %v392
    %v669 = vunpack.c.h.b16 %v392
    %v670 = vunpack.c.l.b16 %v393
    %v671 = vunpack.c.l.b16 %v394
    %v672 = vunpack.c.h.b16 %v394
    %v673 = vunpack.c.l.b16 %v395
    %v674 = vunpack.c.l.b16 %v396
    %v675 = vunpack.c.h.b16 %v396
    %v676 = vunpack.c.l.b16 %v397
    %v677 = vunpack.c.l.b16 %v398
    %v678 = vunpack.c.h.b16 %v398
    %v679 = vunpack.c.l.b16 %v399
    %v680 = vunpack.c.l.b16 %v400
    %v681 = vunpack.c.h.b16 %v400
    %v682 = vunpack.c.l.b16 %v401
    %v683 = vunpack.c.l.b16 %v402
    %v684 = vunpack.c.h.b16 %v402
    %v685 = vunpack.c.l.b16 %v403
    %v686 = vunpack.c.l.b16 %v404
    %v687 = vunpack.c.h.b16 %v404
    %v688 = vunpack.c.l.b16 %v405
    %v689 = vunpack.c.l.b16 %v406
    %v690 = vunpack.c.h.b16 %v406
    %v691 = vunpack.c.l.b16 %v407
    %v692 = vunpack.c.l.b16 %v408
    %v693 = vunpack.c.h.b16 %v408
    %v694 = vunpack.c.l.b16 %v409
    %v695 = vunpack.c.l.b16 %v410
    %v696 = vunpack.c.h.b16 %v410
    %v697 = vunpack.c.l.b16 %v411
    %v698 = vunpack.c.l.b16 %v412
    %v699 = vunpack.c.h.b16 %v412
    %v700 = vunpack.c.l.b16 %v413
    %v701 = vunpack.c.l.b16 %v414
    %v702 = vunpack.c.h.b16 %v414
    %v703 = vunpack.c.l.b16 %v415
    %v704 = vunpack.c.l.b16 %v416
    %v705 = vunpack.c.h.b16 %v416
    %v706 = vunpack.c.l.b16 %v417
    %v707 = vunpack.c.l.b16 %v418
    %v708 = vunpack.c.h.b16 %v418
    %v709 = vunpack.c.l.b16 %v419
    %v710 = vunpack.c.l.b16 %v420
    %v711 = vunpack.c.h.b16 %v420
    %v712 = vunpack.c.l.b16 %v421
    %v713 = vunpack.c.l.b16 %v422
    %v714 = vunpack.c.h.b16 %v422
    %v715 = vunpack.c.l.b16 %v423
    %v716 = vunpack.c.l.b16 %v424
    %v717 = vunpack.c.h.b16 %v424
    %v718 = vunpack.c.l.b16 %v425
    %v719 = vunpack.c.l.b16 %v426
    %v720 = vunpack.c.h.b16 %v426
    %v721 = vunpack.c.l.b16 %v427
    %v722 = vunpack.c.l.b16 %v428
    %v723 = vunpack.c.h.b16 %v428
    %v724 = vunpack.c.l.b16 %v429
    %v725 = vunpack.c.l.b16 %v430
    %v726 = vunpack.c.h.b16 %v430
    %v727 = vunpack.c.l.b16 %v431
    %v728 = vunpack.c.l.b16 %v432
    %v729 = vunpack.c.h.b16 %v432
    %v730 = vunpack.c.l.b16 %v433
    %v731 = vunpack.c.l.b16 %v434
    %v732 = vunpack.c.h.b16 %v434
    %v733 = vunpack.c.l.b16 %v435
    %v734 = vunpack.c.l.b16 %v436
    %v735 = vunpack.c.h.b16 %v436
    %v736 = vunpack.c.l.b16 %v437
    %v737 = vunpack.c.l.b16 %v438
    %v738 = vunpack.c.h.b16 %v438
    %v739 = vunpack.c.l.b16 %v439
    %v740 = vunpack.c.l.b16 %v440
    %v741 = vunpack.c.h.b16 %v440
    %v742 = vunpack.c.l.b16 %v441
    %v743 = vunpack.c.l.b16 %v442
    %v744 = vunpack.c.h.b16 %v442
    %v745 = vunpack.c.l.b16 %v443
    %v746 = vunpack.c.l.b16 %v444
    %v747 = vunpack.c.h.b16 %v444
    %v748 = vunpack.c.l.b16 %v445
    %v749 = vunpack.c.l.b16 %v446
    %v750 = vunpack.c.h.b16 %v446
    %v751 = vunpack.c.l.b16 %v447
    %v752 = vunpack.c.l.b16 %v448
    %v753 = vunpack.c.h.b16 %v448
    %v754 = vunpack.c.l.b16 %v449
    %v755 = vunpack.c.l.b16 %v450
    %v756 = vunpack.c.h.b16 %v450
    %v757 = vunpack.c.l.b16 %v451
    %v758 = vunpack.c.l.b16 %v452
    %v759 = vunpack.c.h.b16 %v452
    %v760 = vunpack.c.l.b16 %v453
    %v761 = vunpack.c.l.b16 %v454
    %v762 = vunpack.c.h.b16 %v454
    %v763 = vunpack.c.l.b16 %v455
    %v764 = vunpack.c.l.b16 %v456
    %v765 = vunpack.c.h.b16 %v456
    %v766 = vunpack.c.l.b16 %v457
    %v767 = vunpack.c.l.b16 %v458
    %v768 = vunpack.c.h.b16 %v458
    %v769 = vunpack.c.l.b16 %v459
    %v770 = vunpack.c.l.b16 %v460
    %v771 = vunpack.c.h.b16 %v460
    %v772 = vunpack.c.l.b16 %v461
    %v773 = vunpack.c.l.b16 %v462
    %v774 = vunpack.c.h.b16 %v462
    %v775 = vunpack.c.l.b16 %v463
    %v776 = vunpack.c.l.b16 %v464
    %v777 = vunpack.c.h.b16 %v464
    %v778 = vunpack.c.l.b16 %v465
    %v779 = vunpack.c.l.b16 %v466
    %v780 = vunpack.c.h.b16 %v466
    %v781 = vunpack.c.l.b16 %v467
    %v782 = vunpack.c.l.b16 %v468
    %v783 = vunpack.c.h.b16 %v468
    %v784 = vunpack.c.l.b16 %v469
    %v785 = vunpack.c.l.b16 %v470
    %v786 = vunpack.c.h.b16 %v470
    %v787 = vunpack.c.l.b16 %v471
    %v788 = vunpack.c.l.b16 %v472
    %v789 = vunpack.c.h.b16 %v472
    %v790 = vunpack.c.l.b16 %v473
    %v791 = vunpack.c.l.b16 %v474
    %v792 = vunpack.c.h.b16 %v474
    %v793 = vunpack.c.l.b16 %v475
    %v794 = vunpack.c.l.b16 %v476
    %v795 = vunpack.c.h.b16 %v476
    %v796 = vunpack.c.l.b16 %v477
    %v797 = vunpack.c.l.b16 %v478
    %v798 = vunpack.c.h.b16 %v478
    %v799 = vunpack.c.l.b16 %v479
    %v800 = vunpack.c.l.b16 %v480
    %v801 = vunpack.c.h.b16 %v480
    %v802 = vunpack.c.l.b16 %v481
    %v803 = vunpack.c.l.b16 %v482
    %v804 = vunpack.c.h.b16 %v482
    %v805 = vunpack.c.l.b16 %v483
    %v806 = vunpack.c.l.b16 %v484
    %v807 = vunpack.c.h.b16 %v484
    %v808 = vunpack.c.l.b16 %v485
    %v809 = vunpack.c.l.b16 %v486
    %v810 = vunpack.c.h.b16 %v486
    %v811 = vunpack.c.l.b16 %v487
    %v812 = vunpack.c.l.b16 %v488
    %v813 = vunpack.c.h.b16 %v488
    %v814 = vunpack.c.l.b16 %v489
    %v815 = vunpack.c.l.b16 %v490
    %v816 = vunpack.c.h.b16 %v490
    %v817 = vunpack.c.l.b16 %v491
    %v818 = vunpack.c.l.b16 %v492
    %v819 = vunpack.c.h.b16 %v492
    %v820 = vunpack.c.l.b16 %v493
    %v821 = vunpack.c.l.b16 %v494
    %v822 = vunpack.c.h.b16 %v494
    %v823 = vunpack.c.l.b16 %v495
    %v824 = vunpack.c.l.b16 %v496
    %v825 = vunpack.c.h.b16 %v496
    %v826 = vunpack.c.l.b16 %v497
    %v827 = vunpack.c.l.b16 %v498
    %v828 = vunpack.c.h.b16 %v498
    %v829 = vunpack.c.l.b16 %v499
    %v830 = vunpack.c.l.b16 %v500
    %v831 = vunpack.c.h.b16 %v500
    %v832 = vunpack.c.l.b16 %v501
    %v833 = vunpack.c.l.b16 %v502
    %v834 = vunpack.c.h.b16 %v502
    %v835 = vunpack.c.l.b16 %v503
    %v836 = vunpack.c.l.b16 %v504
    %v837 = vunpack.c.h.b16 %v504
    %v838 = vunpack.c.l.b16 %v505
    %v839 = vunpack.c.l.b16 %v506
    %v840 = vunpack.c.h.b16 %v506
    %v841 = vunpack.c.l.b16 %v507
    %v842 = vunpack.c.l.b16 %v508
    %v843 = vunpack.c.h.b16 %v508
    %v844 = vunpack.c.l.b16 %v509
    %v845 = vunpack.c.l.b16 %v510
    %v846 = vunpack.c.h.b16 %v510
    %v847 = vunpack.c.l.b16 %v511
    %v848 = vunpack.c.l.b16 %v512
    %v849 = vunpack.c.h.b16 %v512
    %v850 = vunpack.c.l.b16 %v513
    %v851 = vpack.c.b16 %v662, %v659
    %v852 = vpack.c.b16 %v663, %v660
    %v853 = vpack.c.b16 %v664, %v661
    %v854 = vpack.c.b16 %v668, %v665
    %v855 = vpack.c.b16 %v669, %v666
    %v856 = vpack.c.b16 %v670, %v667
    %v857 = vpack.c.b16 %v674, %v671
    %v858 = vpack.c.b16 %v675, %v672
    %v859 = vpack.c.b16 %v676, %v673
    %v860 = vpack.c.b16 %v680, %v677
    %v861 = vpack.c.b16 %v681, %v678
    %v862 = vpack.c.b16 %v682, %v679
    %v863 = vpack.c.b16 %v686, %v683
    %v864 = vpack.c.b16 %v687, %v684
    %v865 = vpack.c.b16 %v688, %v685
    %v866 = vpack.c.b16 %v692, %v689
    %v867 = vpack.c.b16 %v693, %v690
    %v868 = vpack.c.b16 %v694, %v691
    %v869 = vpack.c.b16 %v698, %v695
    %v870 = vpack.c.b16 %v699, %v696
    %v871 = vpack.c.b16 %v700, %v697
    %v872 = vpack.c.b16 %v704, %v701
    %v873 = vpack.c.b16 %v705, %v702
    %v874 = vpack.c.b16 %v706, %v703
    %v875 = vpack.c.b16 %v710, %v707
    %v876 = vpack.c.b16 %v711, %v708
    %v877 = vpack.c.b16 %v712, %v709
    %v878 = vpack.c.b16 %v716, %v713
    %v879 = vpack.c.b16 %v717, %v714
    %v880 = vpack.c.b16 %v718, %v715
    %v881 = vpack.c.b16 %v722, %v719
    %v882 = vpack.c.b16 %v723, %v720
    %v883 = vpack.c.b16 %v724, %v721
    %v884 = vpack.c.b16 %v728, %v725
    %v885 = vpack.c.b16 %v729, %v726
    %v886 = vpack.c.b16 %v730, %v727
    %v887 = vpack.c.b16 %v734, %v731
    %v888 = vpack.c.b16 %v735, %v732
    %v889 = vpack.c.b16 %v736, %v733
    %v890 = vpack.c.b16 %v740, %v737
    %v891 = vpack.c.b16 %v741, %v738
    %v892 = vpack.c.b16 %v742, %v739
    %v893 = vpack.c.b16 %v746, %v743
    %v894 = vpack.c.b16 %v747, %v744
    %v895 = vpack.c.b16 %v748, %v745
    %v896 = vpack.c.b16 %v752, %v749
    %v897 = vpack.c.b16 %v753, %v750
    %v898 = vpack.c.b16 %v754, %v751
    %v899 = vpack.c.b16 %v758, %v755
    %v900 = vpack.c.b16 %v759, %v756
    %v901 = vpack.c.b16 %v760, %v757
    %v902 = vpack.c.b16 %v764, %v761
    %v903 = vpack.c.b16 %v765, %v762
    %v904 = vpack.c.b16 %v766, %v763
    %v905 = vpack.c.b16 %v770, %v767
    %v906 = vpack.c.b16 %v771, %v768
    %v907 = vpack.c.b16 %v772, %v769
    %v908 = vpack.c.b16 %v776, %v773
    %v909 = vpack.c.b16 %v777, %v774
    %v910 = vpack.c.b16 %v778, %v775
    %v911 = vpack.c.b16 %v782, %v779
    %v912 = vpack.c.b16 %v783, %v780
    %v913 = vpack.c.b16 %v784, %v781
    %v914 = vpack.c.b16 %v788, %v785
    %v915 = vpack.c.b16 %v789, %v786
    %v916 = vpack.c.b16 %v790, %v787
    %v917 = vpack.c.b16 %v794, %v791
    %v918 = vpack.c.b16 %v795, %v792
    %v919 = vpack.c.b16 %v796, %v793
    %v920 = vpack.c.b16 %v800, %v797
    %v921 = vpack.c.b16 %v801, %v798
    %v922 = vpack.c.b16 %v802, %v799
    %v923 = vpack.c.b16 %v806, %v803
    %v924 = vpack.c.b16 %v807, %v804
    %v925 = vpack.c.b16 %v808, %v805
    %v926 = vpack.c.b16 %v812, %v809
    %v927 = vpack.c.b16 %v813, %v810
    %v928 = vpack.c.b16 %v814, %v811
    %v929 = vpack.c.b16 %v818, %v815
    %v930 = vpack.c.b16 %v819, %v816
    %v931 = vpack.c.b16 %v820, %v817
    %v932 = vpack.c.b16 %v824, %v821
    %v933 = vpack.c.b16 %v825, %v822
    %v934 = vpack.c.b16 %v826, %v823
    %v935 = vpack.c.b16 %v830, %v827
    %v936 = vpack.c.b16 %v831, %v828
    %v937 = vpack.c.b16 %v832, %v829
    %v938 = vpack.c.b16 %v836, %v833
    %v939 = vpack.c.b16 %v837, %v834
    %v940 = vpack.c.b16 %v838, %v835
    %v941 = vpack.c.b16 %v842, %v839
    %v942 = vpack.c.b16 %v843, %v840
    %v943 = vpack.c.b16 %v844, %v841
    %v944 = vpack.c.b16 %v848, %v845
    %v945 = vpack.c.b16 %v849, %v846
    %v946 = vpack.c.b16 %v850, %v847
    %1043 = vmatprep.subr.bf16.mxu0 %v852
    %1044 = vmatpush1.bf16.msra.mxu0 %v851
    %1045 = vmatprep.subr.bf16.mxu0 %v855
    %1046 = vmatpush1.bf16.msra.mxu0 %v854
    %1047 = vmatprep.subr.bf16.mxu0 %v858
    %1048 = vmatpush1.bf16.msra.mxu0 %v857
    %1049 = vmatprep.subr.bf16.mxu0 %v861
    %1050 = vmatpush1.bf16.msra.mxu0 %v860
    %1051 = vmatprep.subr.bf16.mxu0 %v864
    %1052 = vmatpush1.bf16.msra.mxu0 %v863
    %1053 = vmatprep.subr.bf16.mxu0 %v867
    %1054 = vmatpush1.bf16.msra.mxu0 %v866
    %1055 = vmatprep.subr.bf16.mxu0 %v870
    %1056 = vmatpush1.bf16.msra.mxu0 %v869
    %1057 = vmatprep.subr.bf16.mxu0 %v873
    %1058 = vmatpush1.bf16.msra.mxu0 %v872
    %1059 = vmatprep.subr.bf16.mxu0 %v876
    %1060 = vmatpush1.bf16.msra.mxu0 %v875
    %1061 = vmatprep.subr.bf16.mxu0 %v879
    %1062 = vmatpush1.bf16.msra.mxu0 %v878
    %1063 = vmatprep.subr.bf16.mxu0 %v882
    %1064 = vmatpush1.bf16.msra.mxu0 %v881
    %1065 = vmatprep.subr.bf16.mxu0 %v885
    %1066 = vmatpush1.bf16.msra.mxu0 %v884
    %1067 = vmatprep.subr.bf16.mxu0 %v888
    %1068 = vmatpush1.bf16.msra.mxu0 %v887
    %1069 = vmatprep.subr.bf16.mxu0 %v891
    %1070 = vmatpush1.bf16.msra.mxu0 %v890
    %1071 = vmatprep.subr.bf16.mxu0 %v894
    %1072 = vmatpush1.bf16.msra.mxu0 %v893
    %1073 = vmatprep.subr.bf16.mxu0 %v897
    %1074 = vmatpush1.bf16.msra.mxu0 %v896
    %1075 = vmatprep.mubr.bf16.mxu0 %v383
    %1076 = vmatmul.mubr.bf16.gmra.mrb[0].mxu0 %v382
    %v1077 = vpop.f32.mrb[0].mxu0
    %v1078 = vadd.f32 %v519, %v1077
    %v1079 = vpop.f32.mrb[0].mxu0
    %v1080 = vadd.f32 %v523, %v1079
    %v1081 = vpop.f32.mrb[0].mxu0
    %v1082 = vpop.f32.mrb[0].mxu0
    %1083 = vdwg.mxu0
    %1084 = vmatprep.subr.bf16.mxu0 %v900
    %1085 = vmatpush1.bf16.msra.mxu0 %v899
    %1086 = vmatprep.subr.bf16.mxu0 %v903
    %1087 = vmatpush1.bf16.msra.mxu0 %v902
    %1088 = vmatprep.subr.bf16.mxu0 %v906
    %1089 = vmatpush1.bf16.msra.mxu0 %v905
    %1090 = vmatprep.subr.bf16.mxu0 %v909
    %1091 = vmatpush1.bf16.msra.mxu0 %v908
    %1092 = vmatprep.subr.bf16.mxu0 %v912
    %1093 = vmatpush1.bf16.msra.mxu0 %v911
    %1094 = vmatprep.subr.bf16.mxu0 %v915
    %1095 = vmatpush1.bf16.msra.mxu0 %v914
    %1096 = vmatprep.subr.bf16.mxu0 %v918
    %1097 = vmatpush1.bf16.msra.mxu0 %v917
    %1098 = vmatprep.subr.bf16.mxu0 %v921
    %1099 = vmatpush1.bf16.msra.mxu0 %v920
    %1100 = vmatprep.subr.bf16.mxu0 %v924
    %1101 = vmatpush1.bf16.msra.mxu0 %v923
    %1102 = vmatprep.subr.bf16.mxu0 %v927
    %1103 = vmatpush1.bf16.msra.mxu0 %v926
    %1104 = vmatprep.subr.bf16.mxu0 %v930
    %1105 = vmatpush1.bf16.msra.mxu0 %v929
    %1106 = vmatprep.subr.bf16.mxu0 %v933
    %1107 = vmatpush1.bf16.msra.mxu0 %v932
    %1108 = vmatprep.subr.bf16.mxu0 %v936
    %1109 = vmatpush1.bf16.msra.mxu0 %v935
    %1110 = vmatprep.subr.bf16.mxu0 %v939
    %1111 = vmatpush1.bf16.msra.mxu0 %v938
    %1112 = vmatprep.subr.bf16.mxu0 %v942
    %1113 = vmatpush1.bf16.msra.mxu0 %v941
    %1114 = vmatprep.subr.bf16.mxu0 %v945
    %1115 = vmatpush1.bf16.msra.mxu0 %v944
    %1116 = vmatprep.mubr.bf16.mxu0 %v385
    %1117 = vmatmul.mubr.bf16.gmra.mrb[0].mxu0 %v384
    %v1118 = vpop.f32.mrb[0].mxu0
    %v1119 = vadd.f32 %v1078, %v1118
    %v1120 = vpop.f32.mrb[0].mxu0
    %v1121 = vadd.f32 %v1080, %v1120
    %v1122 = vpop.f32.mrb[0].mxu0
    %v1123 = vpop.f32.mrb[0].mxu0
    %1124 = vdwg.mxu0
    %1125 = vmatprep.subr.bf16.mxu0 0
    %1126 = vmatpush1.bf16.msra.mxu0 %v853
    %1127 = vmatprep.subr.bf16.mxu0 0
    %1128 = vmatpush1.bf16.msra.mxu0 %v856
    %1129 = vmatprep.subr.bf16.mxu0 0
    %1130 = vmatpush1.bf16.msra.mxu0 %v859
    %1131 = vmatprep.subr.bf16.mxu0 0
    %1132 = vmatpush1.bf16.msra.mxu0 %v862
    %1133 = vmatprep.subr.bf16.mxu0 0
    %1134 = vmatpush1.bf16.msra.mxu0 %v865
    %1135 = vmatprep.subr.bf16.mxu0 0
    %1136 = vmatpush1.bf16.msra.mxu0 %v868
    %1137 = vmatprep.subr.bf16.mxu0 0
    %1138 = vmatpush1.bf16.msra.mxu0 %v871
    %1139 = vmatprep.subr.bf16.mxu0 0
    %1140 = vmatpush1.bf16.msra.mxu0 %v874
    %1141 = vmatprep.subr.bf16.mxu0 0
    %1142 = vmatpush1.bf16.msra.mxu0 %v877
    %1143 = vmatprep.subr.bf16.mxu0 0
    %1144 = vmatpush1.bf16.msra.mxu0 %v880
    %1145 = vmatprep.subr.bf16.mxu0 0
    %1146 = vmatpush1.bf16.msra.mxu0 %v883
    %1147 = vmatprep.subr.bf16.mxu0 0
    %1148 = vmatpush1.bf16.msra.mxu0 %v886
    %1149 = vmatprep.subr.bf16.mxu0 0
    %1150 = vmatpush1.bf16.msra.mxu0 %v889
    %1151 = vmatprep.subr.bf16.mxu0 0
    %1152 = vmatpush1.bf16.msra.mxu0 %v892
    %1153 = vmatprep.subr.bf16.mxu0 0
    %1154 = vmatpush1.bf16.msra.mxu0 %v895
    %1155 = vmatprep.subr.bf16.mxu0 0
    %1156 = vmatpush1.bf16.msra.mxu0 %v898
    %1157 = vmatprep.mubr.bf16.mxu0 %v383
    %1158 = vmatmul.mubr.bf16.gmra.mrb[0].mxu0 %v382
    %v1159 = vpop.f32.mrb[0].mxu0
    %v1160 = vadd.f32 %v527, %v1159
    %v1161 = vpop.f32.mrb[0].mxu0
    %v1162 = vpop.f32.mrb[0].mxu0
    %v1163 = vpop.f32.mrb[0].mxu0
    %1164 = vdwg.mxu0
    %1165 = vmatprep.subr.bf16.mxu0 0
    %1166 = vmatpush1.bf16.msra.mxu0 %v901
    %1167 = vmatprep.subr.bf16.mxu0 0
    %1168 = vmatpush1.bf16.msra.mxu0 %v904
    %1169 = vmatprep.subr.bf16.mxu0 0
    %1170 = vmatpush1.bf16.msra.mxu0 %v907
    %1171 = vmatprep.subr.bf16.mxu0 0
    %1172 = vmatpush1.bf16.msra.mxu0 %v910
    %1173 = vmatprep.subr.bf16.mxu0 0
    %1174 = vmatpush1.bf16.msra.mxu0 %v913
    %1175 = vmatprep.subr.bf16.mxu0 0
    %1176 = vmatpush1.bf16.msra.mxu0 %v916
    %1177 = vmatprep.subr.bf16.mxu0 0
    %1178 = vmatpush1.bf16.msra.mxu0 %v919
    %1179 = vmatprep.subr.bf16.mxu0 0
    %1180 = vmatpush1.bf16.msra.mxu0 %v922
    %1181 = vmatprep.subr.bf16.mxu0 0
    %1182 = vmatpush1.bf16.msra.mxu0 %v925
    %1183 = vmatprep.subr.bf16.mxu0 0
    %1184 = vmatpush1.bf16.msra.mxu0 %v928
    %1185 = vmatprep.subr.bf16.mxu0 0
    %1186 = vmatpush1.bf16.msra.mxu0 %v931
    %1187 = vmatprep.subr.bf16.mxu0 0
    %1188 = vmatpush1.bf16.msra.mxu0 %v934
    %1189 = vmatprep.subr.bf16.mxu0 0
    %1190 = vmatpush1.bf16.msra.mxu0 %v937
    %1191 = vmatprep.subr.bf16.mxu0 0
    %1192 = vmatpush1.bf16.msra.mxu0 %v940
    %1193 = vmatprep.subr.bf16.mxu0 0
    %1194 = vmatpush1.bf16.msra.mxu0 %v943
    %1195 = vmatprep.subr.bf16.mxu0 0
    %1196 = vmatpush1.bf16.msra.mxu0 %v946
    %1197 = vmatprep.mubr.bf16.mxu0 %v385
    %1198 = vmatmul.mubr.bf16.gmra.mrb[0].mxu0 %v384
    %v1199 = vpop.f32.mrb[0].mxu0
    %v1200 = vadd.f32 %v1160, %v1199
    %v1201 = vpop.f32.mrb[0].mxu0
    %v1202 = vpop.f32.mrb[0].mxu0
    %v1203 = vpop.f32.mrb[0].mxu0
    %1204 = vdwg.mxu0
    %v1205 = vmax.f32 %v1119, 0.0
    %v1206 = vmax.f32 %v1121, 0.0
    %v1207 = vmax.f32 %v1200, 0.0
    %v1208 = vpack.c.bf16 %v1205, %v1205
    %v1209 = vpack.c.bf16 %v1206, %v1206
    %v1210 = vpack.c.bf16 %v1207, %v1207
    %v1211 = vld [vmem:[#allocation8] sm:$0xf]
    %v1212 = vld [vmem:[#allocation8 + $0x4] sm:$0xf]
    %v1213 = vld [vmem:[#allocation8 + $0x8] sm:$0xf]
    %v1214 = vld [vmem:[#allocation8 + $0xc] sm:$0xf]
    %v1215 = vld [vmem:[#allocation8 + $0x10] sm:$0xf]
    %v1216 = vld [vmem:[#allocation8 + $0x14] sm:$0xf]
    %v1217 = vld [vmem:[#allocation8 + $0x18] sm:$0xf]
    %v1218 = vld [vmem:[#allocation8 + $0x1c] sm:$0xf]
    %v1219 = vld [vmem:[#allocation8 + $0x20] sm:$0xf]
    %v1220 = vld [vmem:[#allocation8 + $0x24] sm:$0xf]
    %v1221 = vld [vmem:[#allocation8 + $0x28] sm:$0xf]
    %v1222 = vld [vmem:[#allocation8 + $0x2c] sm:$0xf]
    %v1223 = vld [vmem:[#allocation8 + $0x30] sm:$0xf]
    %v1224 = vld [vmem:[#allocation8 + $0x34] sm:$0xf]
    %v1225 = vld [vmem:[#allocation8 + $0x38] sm:$0xf]
    %v1226 = vld [vmem:[#allocation8 + $0x3c] sm:$0xf]
    %v1227 = vld [vmem:[#allocation8 + $0x40] sm:$0xf]
    %v1228 = vld [vmem:[#allocation8 + $0x44] sm:$0xf]
    %v1229 = vld [vmem:[#allocation8 + $0x48] sm:$0xf]
    %v1230 = vld [vmem:[#allocation8 + $0x4c] sm:$0xf]
    %v1231 = vld [vmem:[#allocation8 + $0x50] sm:$0xf]
    %v1232 = vld [vmem:[#allocation8 + $0x54] sm:$0xf]
    %v1233 = vld [vmem:[#allocation8 + $0x58] sm:$0xf]
    %v1234 = vld [vmem:[#allocation8 + $0x5c] sm:$0xf]
    %v1235 = vld [vmem:[#allocation8 + $0x60] sm:$0xf]
    %v1236 = vld [vmem:[#allocation8 + $0x64] sm:$0xf]
    %v1237 = vld [vmem:[#allocation8 + $0x68] sm:$0xf]
    %v1238 = vld [vmem:[#allocation8 + $0x6c] sm:$0xf]
    %v1239 = vld [vmem:[#allocation8 + $0x70] sm:$0xf]
    %v1240 = vld [vmem:[#allocation8 + $0x74] sm:$0xf]
    %v1241 = vld [vmem:[#allocation8 + $0x78] sm:$0xf]
    %v1242 = vld [vmem:[#allocation8 + $0x7c] sm:$0xf]
    %v1243 = vld [vmem:[#allocation8 + $0x80] sm:$0xf]
    %v1244 = vld [vmem:[#allocation8 + $0x84] sm:$0xf]
    %v1245 = vld [vmem:[#allocation8 + $0x88] sm:$0xf]
    %v1246 = vld [vmem:[#allocation8 + $0x8c] sm:$0xf]
    %v1247 = vld [vmem:[#allocation8 + $0x90] sm:$0xf]
    %v1248 = vld [vmem:[#allocation8 + $0x94] sm:$0xf]
    %v1249 = vld [vmem:[#allocation8 + $0x98] sm:$0xf]
    %v1250 = vld [vmem:[#allocation8 + $0x9c] sm:$0xf]
    %v1251 = vld [vmem:[#allocation8 + $0xa0] sm:$0xf]
    %v1252 = vld [vmem:[#allocation8 + $0xa4] sm:$0xf]
    %v1253 = vld [vmem:[#allocation8 + $0xa8] sm:$0xf]
    %v1254 = vld [vmem:[#allocation8 + $0xac] sm:$0xf]
    %v1255 = vld [vmem:[#allocation8 + $0xb0] sm:$0xf]
    %v1256 = vld [vmem:[#allocation8 + $0xb4] sm:$0xf]
    %v1257 = vld [vmem:[#allocation8 + $0xb8] sm:$0xf]
    %v1258 = vld [vmem:[#allocation8 + $0xbc] sm:$0xf]
    %v1259 = vld [vmem:[%s6] sm:$0x1]
    %v1261 = vlaneseq
    %v1262 = vshrl.u32 %v1261, 7
    %v1263 = vsub.s32 0, %v1262
    %v1264 = vrot.slane %v1259, %v1263
    %v1314 = vunpack.c.l.b16 %v1211
    %v1315 = vunpack.c.l.b16 %v1212
    %v1316 = vunpack.c.l.b16 %v1213
    %v1317 = vunpack.c.l.b16 %v1214
    %v1318 = vunpack.c.l.b16 %v1215
    %v1319 = vunpack.c.l.b16 %v1216
    %v1320 = vunpack.c.l.b16 %v1217
    %v1321 = vunpack.c.l.b16 %v1218
    %v1322 = vunpack.c.l.b16 %v1219
    %v1323 = vunpack.c.l.b16 %v1220
    %v1324 = vunpack.c.l.b16 %v1221
    %v1325 = vunpack.c.l.b16 %v1222
    %v1326 = vunpack.c.l.b16 %v1223
    %v1327 = vunpack.c.l.b16 %v1224
    %v1328 = vunpack.c.l.b16 %v1225
    %v1329 = vunpack.c.l.b16 %v1226
    %v1330 = vunpack.c.l.b16 %v1227
    %v1331 = vunpack.c.l.b16 %v1228
    %v1332 = vunpack.c.l.b16 %v1229
    %v1333 = vunpack.c.l.b16 %v1230
    %v1334 = vunpack.c.l.b16 %v1231
    %v1335 = vunpack.c.l.b16 %v1232
    %v1336 = vunpack.c.l.b16 %v1233
    %v1337 = vunpack.c.l.b16 %v1234
    %v1338 = vunpack.c.l.b16 %v1235
    %v1339 = vunpack.c.l.b16 %v1236
    %v1340 = vunpack.c.l.b16 %v1237
    %v1341 = vunpack.c.l.b16 %v1238
    %v1342 = vunpack.c.l.b16 %v1239
    %v1343 = vunpack.c.l.b16 %v1240
    %v1344 = vunpack.c.l.b16 %v1241
    %v1345 = vunpack.c.l.b16 %v1242
    %v1346 = vunpack.c.l.b16 %v1243
    %v1347 = vunpack.c.l.b16 %v1244
    %v1348 = vunpack.c.l.b16 %v1245
    %v1349 = vunpack.c.l.b16 %v1246
    %v1350 = vunpack.c.l.b16 %v1247
    %v1351 = vunpack.c.l.b16 %v1248
    %v1352 = vunpack.c.l.b16 %v1249
    %v1353 = vunpack.c.l.b16 %v1250
    %v1354 = vunpack.c.l.b16 %v1251
    %v1355 = vunpack.c.l.b16 %v1252
    %v1356 = vunpack.c.l.b16 %v1253
    %v1357 = vunpack.c.l.b16 %v1254
    %v1358 = vunpack.c.l.b16 %v1255
    %v1359 = vunpack.c.l.b16 %v1256
    %v1360 = vunpack.c.l.b16 %v1257
    %v1361 = vunpack.c.l.b16 %v1258
    %v1362 = vpack.c.b16 %v1315, %v1314
    %v1363 = vpack.c.b16 %v1317, %v1316
    %v1364 = vpack.c.b16 %v1319, %v1318
    %v1365 = vpack.c.b16 %v1321, %v1320
    %v1366 = vpack.c.b16 %v1323, %v1322
    %v1367 = vpack.c.b16 %v1325, %v1324
    %v1368 = vpack.c.b16 %v1327, %v1326
    %v1369 = vpack.c.b16 %v1329, %v1328
    %v1370 = vpack.c.b16 %v1331, %v1330
    %v1371 = vpack.c.b16 %v1333, %v1332
    %v1372 = vpack.c.b16 %v1335, %v1334
    %v1373 = vpack.c.b16 %v1337, %v1336
    %v1374 = vpack.c.b16 %v1339, %v1338
    %v1375 = vpack.c.b16 %v1341, %v1340
    %v1376 = vpack.c.b16 %v1343, %v1342
    %v1377 = vpack.c.b16 %v1345, %v1344
    %v1378 = vpack.c.b16 %v1347, %v1346
    %v1379 = vpack.c.b16 %v1349, %v1348
    %v1380 = vpack.c.b16 %v1351, %v1350
    %v1381 = vpack.c.b16 %v1353, %v1352
    %v1382 = vpack.c.b16 %v1355, %v1354
    %v1383 = vpack.c.b16 %v1357, %v1356
    %v1384 = vpack.c.b16 %v1359, %v1358
    %v1385 = vpack.c.b16 %v1361, %v1360
    %1410 = vmatprep.subr.bf16.mxu0 0
    %1411 = vmatpush1.bf16.msra.mxu0 %v1362
    %1412 = vmatprep.subr.bf16.mxu0 0
    %1413 = vmatpush1.bf16.msra.mxu0 %v1363
    %1414 = vmatprep.subr.bf16.mxu0 0
    %1415 = vmatpush1.bf16.msra.mxu0 %v1364
    %1416 = vmatprep.subr.bf16.mxu0 0
    %1417 = vmatpush1.bf16.msra.mxu0 %v1365
    %1418 = vmatprep.subr.bf16.mxu0 0
    %1419 = vmatpush1.bf16.msra.mxu0 %v1366
    %1420 = vmatprep.subr.bf16.mxu0 0
    %1421 = vmatpush1.bf16.msra.mxu0 %v1367
    %1422 = vmatprep.subr.bf16.mxu0 0
    %1423 = vmatpush1.bf16.msra.mxu0 %v1368
    %1424 = vmatprep.subr.bf16.mxu0 0
    %1425 = vmatpush1.bf16.msra.mxu0 %v1369
    %1426 = vmatprep.subr.bf16.mxu0 0
    %1427 = vmatpush1.bf16.msra.mxu0 %v1370
    %1428 = vmatprep.subr.bf16.mxu0 0
    %1429 = vmatpush1.bf16.msra.mxu0 %v1371
    %1430 = vmatprep.subr.bf16.mxu0 0
    %1431 = vmatpush1.bf16.msra.mxu0 %v1372
    %1432 = vmatprep.subr.bf16.mxu0 0
    %1433 = vmatpush1.bf16.msra.mxu0 %v1373
    %1434 = vmatprep.subr.bf16.mxu0 0
    %1435 = vmatpush1.bf16.msra.mxu0 %v1374
    %1436 = vmatprep.subr.bf16.mxu0 0
    %1437 = vmatpush1.bf16.msra.mxu0 %v1375
    %1438 = vmatprep.subr.bf16.mxu0 0
    %1439 = vmatpush1.bf16.msra.mxu0 %v1376
    %1440 = vmatprep.subr.bf16.mxu0 0
    %1441 = vmatpush1.bf16.msra.mxu0 %v1377
    %1442 = vmatprep.mubr.bf16.mxu0 %v1209
    %1443 = vmatmul.mubr.bf16.gmra.mrb[0].mxu0 %v1208
    %v1444 = vpop.f32.mrb[0].mxu0
    %v1445 = vadd.f32 %v1264, %v1444
    %v1446 = vpop.f32.mrb[0].mxu0
    %v1447 = vpop.f32.mrb[0].mxu0
    %v1448 = vpop.f32.mrb[0].mxu0
    %1449 = vdwg.mxu0
    %1450 = vmatprep.subr.bf16.mxu0 0
    %1451 = vmatpush1.bf16.msra.mxu0 %v1378
    %1452 = vmatprep.subr.bf16.mxu0 0
    %1453 = vmatpush1.bf16.msra.mxu0 %v1379
    %1454 = vmatprep.subr.bf16.mxu0 0
    %1455 = vmatpush1.bf16.msra.mxu0 %v1380
    %1456 = vmatprep.subr.bf16.mxu0 0
    %1457 = vmatpush1.bf16.msra.mxu0 %v1381
    %1458 = vmatprep.subr.bf16.mxu0 0
    %1459 = vmatpush1.bf16.msra.mxu0 %v1382
    %1460 = vmatprep.subr.bf16.mxu0 0
    %1461 = vmatpush1.bf16.msra.mxu0 %v1383
    %1462 = vmatprep.subr.bf16.mxu0 0
    %1463 = vmatpush1.bf16.msra.mxu0 %v1384
    %1464 = vmatprep.subr.bf16.mxu0 0
    %1465 = vmatpush1.bf16.msra.mxu0 %v1385
    %1466 = vmatprep.subr.bf16.mxu0 0
    %1467 = vmatpush1.bf16.msra.mxu0 0
    %1468 = vmatprep.subr.bf16.mxu0 0
    %1469 = vmatpush1.bf16.msra.mxu0 0
    %1470 = vmatprep.subr.bf16.mxu0 0
    %1471 = vmatpush1.bf16.msra.mxu0 0
    %1472 = vmatprep.subr.bf16.mxu0 0
    %1473 = vmatpush1.bf16.msra.mxu0 0
    %1474 = vmatprep.subr.bf16.mxu0 0
    %1475 = vmatpush1.bf16.msra.mxu0 0
    %1476 = vmatprep.subr.bf16.mxu0 0
    %1477 = vmatpush1.bf16.msra.mxu0 0
    %1478 = vmatprep.subr.bf16.mxu0 0
    %1479 = vmatpush1.bf16.msra.mxu0 0
    %1480 = vmatprep.subr.bf16.mxu0 0
    %1481 = vmatpush1.bf16.msra.mxu0 0
    %1482 = vmatprep.mubr.bf16.mxu0 0
    %1483 = vmatmul.mubr.bf16.gmra.mrb[0].mxu0 %v1210
    %v1484 = vpop.f32.mrb[0].mxu0
    %v1485 = vadd.f32 %v1445, %v1484
    %v1486 = vpop.f32.mrb[0].mxu0
    %v1487 = vpop.f32.mrb[0].mxu0
    %v1488 = vpop.f32.mrb[0].mxu0
    %1489 = vdwg.mxu0
    %v1490 = vtanh.pop %v1485
    %1491 = vst [vmem:[#allocation10] sm:$0xff] %v1490
    // Predicated region
    $region46: #{tpu_custom_call.1} parent=1 // pred_check
      _
    $region47: #{tpu_custom_call.1} parent=1 // pred_check_branch
      %1493 = sbr.rel (0) target = $region49
    $region48: #{tpu_custom_call.1} parent=1 // pred_region
      %s1495 = ssub.s32 128, 128
      %1496 = vsyncadd [#allocation4], %s1495
      %s1498 = sshll.u32 [#allocation10], 4
      %s1499 = int_to_ptr.vmem [resolvable:$true] %s1498
      %1501 = dma.vmem_to_hbm [thread:$0]  %s1499, 128, %s7, [#allocation4]
    $region49: #{tpu_custom_call.1} parent=1 // pred_fallthru
      _
    // Predicated region
    $region50: #{tpu_custom_call.1} parent=1 // pred_check
      _
    $region51: #{tpu_custom_call.1} parent=1 // pred_check_branch
      %1503 = sbr.rel (0) target = $region53
    $region52: #{tpu_custom_call.1} parent=1 // pred_region
      %1504 = dma.done [#allocation4], 128
    $region53: #{tpu_custom_call.1} parent=1 // pred_fallthru
      _
    %1505 = vsyncpa [#allocation3], 1
    %1506 = vsyncpa [#allocation6], 1
    %1507 = vsyncpa [#allocation9], 1
    %1508 = vsyncpa [#allocation4], 1

</llo_original>
